<compile_context>
chip_gen: v5e
topology: v5e:2x2
jax: 0.10.0
libtpu: 0.0.40
codegen_flags: <defaults>
</compile_context>

<pallas_src>
import jax
import jax.numpy as jnp
from jax import lax
from jax.experimental import pallas as pl
from jax.experimental.pallas import tpu as pltpu

EPS = 1e-5
TM_MAX = 256                       # rows of the flattened spatial dim per grid step
VMEM_LIMIT = 48 * 1024 * 1024      # fits v7x (64 MiB physical) with headroom


def _round_up(x, m):
    return (x + m - 1) // m * m


def _tile_rows(m):
    tm = min(TM_MAX, _round_up(m, 8))
    return tm, _round_up(m, tm)


def _cparams(semantics):
    return pltpu.CompilerParams(dimension_semantics=semantics,
                                vmem_limit_bytes=VMEM_LIMIT)


# ----------------------------------------------------------------------------------
# Kernels
# ----------------------------------------------------------------------------------
def _bn_coeffs(stats, m_true, eps):
    mean = stats[0:1, :] * (1.0 / m_true)
    var = stats[1:2, :] * (1.0 / m_true) - mean * mean
    return mean, lax.rsqrt(var + eps)


def _accumulate_stats(stats_ref, y, tm, m_true):
    # Per-channel sum / sum-of-squares accumulated across the grid axis; rows past
    # m_true (zero padding of the flattened spatial dim) are masked out.
    i = pl.program_id(0)

    @pl.when(i == 0)
    def _():
        stats_ref[...] = jnp.zeros_like(stats_ref)

    row = lax.broadcasted_iota(jnp.int32, (tm, 1), 0) + i * tm
    ym = jnp.where(row < m_true, y, 0.0)
    stats_ref[...] += jnp.concatenate(
        [jnp.sum(ym, axis=0, keepdims=True),
         jnp.sum(ym * y, axis=0, keepdims=True)], axis=0)


def make_matmul_stats_kernel(tm, m_true):
    # y = x @ w  (single lane-dense MXU matmul) + BN statistics accumulation.
    def kernel(x_ref, w_ref, y_ref, stats_ref):
        y = jnp.dot(x_ref[...], w_ref[...], preferred_element_type=jnp.float32)
        y_ref[...] = y
        _accumulate_stats(stats_ref, y, tm, m_true)
    return kernel


def make_bn_relu_matmul_stats_kernel(tm, m_true, eps, mm_dtype):
    # Fuses BN+ReLU of the previous conv output into this 1x1 conv's matmul
    # (same flattened length m_true on both sides: the conv is 1x1 / stride 1).
    def kernel(x_ref, sin_ref, g_ref, b_ref, w_ref, y_ref, stats_ref):
        mean, inv = _bn_coeffs(sin_ref[...], m_true, eps)
        a = (x_ref[...] - mean) * inv * g_ref[...] + b_ref[...]
        a = jnp.maximum(a, 0.0).astype(mm_dtype)
        y = jnp.dot(a, w_ref[...], preferred_element_type=jnp.float32)
        y_ref[...] = y
        _accumulate_stats(stats_ref, y, tm, m_true)
    return kernel


def make_bn_act_kernel(m_true, eps, relu, out_dtype):
    def kernel(y_ref, stats_ref, g_ref, b_ref, o_ref):
        mean, inv = _bn_coeffs(stats_ref[...], m_true, eps)
        y = (y_ref[...] - mean) * inv * g_ref[...] + b_ref[...]
        if relu:
            y = jnp.maximum(y, 0.0)
        o_ref[...] = y.astype(out_dtype)
    return kernel


def make_residual_merge_kernel(m_true, eps):
    # out = ReLU( BN_a(y_a) + BN_b(y_b) )  -- both BNs, the add and the ReLU fused.
    def kernel(ya_ref, sa_ref, ga_ref, ba_ref, yb_ref, sb_ref, gb_ref, bb_ref, o_ref):
        ma, ia = _bn_coeffs(sa_ref[...], m_true, eps)
        mb, ib = _bn_coeffs(sb_ref[...], m_true, eps)
        a = (ya_ref[...] - ma) * ia * ga_ref[...] + ba_ref[...]
        b = (yb_ref[...] - mb) * ib * gb_ref[...] + bb_ref[...]
        o_ref[...] = jnp.maximum(a + b, 0.0)
    return kernel


# ----------------------------------------------------------------------------------
# pallas_call wrappers (tiled over the flattened N*H*W dimension)
# ----------------------------------------------------------------------------------
def matmul_with_stats(x2d, w2d, m_true, tm):
    m_pad, k = x2d.shape
    cout = w2d.shape[1]
    return pl.pallas_call(
        make_matmul_stats_kernel(tm, m_true),
        out_shape=(jax.ShapeDtypeStruct((m_pad, cout), jnp.float32),
                   jax.ShapeDtypeStruct((2, cout), jnp.float32)),
        grid=(m_pad // tm,),
        in_specs=[pl.BlockSpec((tm, k), lambda i: (i, 0)),
                  pl.BlockSpec((k, cout), lambda i: (0, 0))],
        out_specs=(pl.BlockSpec((tm, cout), lambda i: (i, 0)),
                   pl.BlockSpec((2, cout), lambda i: (0, 0))),
        compiler_params=_cparams(("arbitrary",)),   # stats accumulator across axis
    )(x2d, w2d)


def bn_relu_matmul_with_stats(y_in, stats_in, gamma, beta, w2d, m_true, tm, eps, mm_dtype):
    m_pad, cin = y_in.shape
    cout = w2d.shape[1]
    return pl.pallas_call(
        make_bn_relu_matmul_stats_kernel(tm, m_true, eps, mm_dtype),
        out_shape=(jax.ShapeDtypeStruct((m_pad, cout), jnp.float32),
                   jax.ShapeDtypeStruct((2, cout), jnp.float32)),
        grid=(m_pad // tm,),
        in_specs=[pl.BlockSpec((tm, cin), lambda i: (i, 0)),
                  pl.BlockSpec((2, cin), lambda i: (0, 0)),
                  pl.BlockSpec((1, cin), lambda i: (0, 0)),
                  pl.BlockSpec((1, cin), lambda i: (0, 0)),
                  pl.BlockSpec((cin, cout), lambda i: (0, 0))],
        out_specs=(pl.BlockSpec((tm, cout), lambda i: (i, 0)),
                   pl.BlockSpec((2, cout), lambda i: (0, 0))),
        compiler_params=_cparams(("arbitrary",)),
    )(y_in, stats_in, gamma, beta, w2d)


def bn_act(y, stats, gamma, beta, m_true, tm, eps, relu, out_dtype):
    m_pad, c = y.shape
    return pl.pallas_call(
        make_bn_act_kernel(m_true, eps, relu, out_dtype),
        out_shape=jax.ShapeDtypeStruct((m_pad, c), out_dtype),
        grid=(m_pad // tm,),
        in_specs=[pl.BlockSpec((tm, c), lambda i: (i, 0)),
                  pl.BlockSpec((2, c), lambda i: (0, 0)),
                  pl.BlockSpec((1, c), lambda i: (0, 0)),
                  pl.BlockSpec((1, c), lambda i: (0, 0))],
        out_specs=pl.BlockSpec((tm, c), lambda i: (i, 0)),
        compiler_params=_cparams(("parallel",)),
    )(y, stats, gamma, beta)


def residual_merge(ya, sa, ga, ba, yb, sb, gb, bb, m_true, tm, eps):
    m_pad, c = ya.shape
    tile = pl.BlockSpec((tm, c), lambda i: (i, 0))
    stat = pl.BlockSpec((2, c), lambda i: (0, 0))
    vec = pl.BlockSpec((1, c), lambda i: (0, 0))
    return pl.pallas_call(
        make_residual_merge_kernel(m_true, eps),
        out_shape=jax.ShapeDtypeStruct((m_pad, c), jnp.float32),
        grid=(m_pad // tm,),
        in_specs=[tile, stat, vec, vec, tile, stat, vec, vec],
        out_specs=tile,
        compiler_params=_cparams(("parallel",)),
    )(ya, sa, ga, ba, yb, sb, gb, bb)


# ----------------------------------------------------------------------------------
# Wrapper glue (layout only: transposes, zero padding, im2col window extraction,
# stride-s shortcut subsampling).  All matmul / BN / ReLU math runs in the kernels.
# ----------------------------------------------------------------------------------
def _im2col_3x3(a, stride, dilation, ho, wo):
    # a: (N, H, W, C) -> (N*ho*wo, 9*C): the nine taps folded into the contraction
    # dim as ONE slab (not nine stacked copies of the activation).
    n, h, w, c = a.shape
    d, s = dilation, stride
    ap = jnp.pad(a, ((0, 0), (d, d), (d, d), (0, 0)))
    cols = []
    for kh in range(3):
        for kw in range(3):
            cols.append(ap[:, kh * d: kh * d + (ho - 1) * s + 1: s,
                             kw * d: kw * d + (wo - 1) * s + 1: s, :])
    return jnp.concatenate(cols, axis=-1).reshape(n * ho * wo, 9 * c)


def bottleneck_psp(x_nchw, p, *, stride, dilation, eps=EPS, mm_dtype=jnp.bfloat16):
    n, cin, h, w = x_nchw.shape
    cmid = p["w1"].shape[-1]
    cout = p["w3"].shape[-1]
    s, d = stride, dilation
    ho, wo = (h - 1) // s + 1, (w - 1) // s + 1
    m, mo = n * h * w, n * ho * wo
    tm1, m_pad = _tile_rows(m)
    tm2, mo_pad = _tile_rows(mo)

    x = jnp.transpose(x_nchw, (0, 2, 3, 1)).astype(jnp.float32)      # NCHW -> NHWC

    def as_row(v):
        return v.reshape(1, -1).astype(jnp.float32)

    # ---- cbnr_1: 1x1 conv (cin -> cmid) + BN + ReLU -------------------------------
    x1 = jnp.pad(x.reshape(m, cin), ((0, m_pad - m), (0, 0))).astype(mm_dtype)
    w1 = p["w1"].reshape(cin, cmid).astype(mm_dtype)
    y1, st1 = matmul_with_stats(x1, w1, m, tm1)
    a1 = bn_act(y1, st1, as_row(p["g1"]), as_row(p["b1"]), m, tm1, eps,
                relu=True, out_dtype=mm_dtype)
    a1 = a1[:m].reshape(n, h, w, cmid)

    # ---- cbnr_2: 3x3 conv (stride s, dilation d), taps folded into K --------------
    x2 = _im2col_3x3(a1, s, d, ho, wo)
    x2 = jnp.pad(x2, ((0, mo_pad - mo), (0, 0)))
    w2 = p["w2"].reshape(9 * cmid, cmid).astype(mm_dtype)
    y2, st2 = matmul_with_stats(x2, w2, mo, tm2)

    # ---- cbn_3: BN+ReLU of y2 fused into the 1x1 conv (cmid -> cout) --------------
    w3 = p["w3"].reshape(cmid, cout).astype(mm_dtype)
    y3, st3 = bn_relu_matmul_with_stats(
        y2, st2, as_row(p["g2"]), as_row(p["b2"]), w3, mo, tm2, eps, mm_dtype)

    # ---- cbn_residual: 1x1 conv, stride s (cin -> cout) ---------------------------
    xr = jnp.pad(x[:, ::s, ::s, :].reshape(mo, cin),
                 ((0, mo_pad - mo), (0, 0))).astype(mm_dtype)
    wr = p["wr"].reshape(cin, cout).astype(mm_dtype)
    yr, str_ = matmul_with_stats(xr, wr, mo, tm2)

    # ---- ReLU( BN(conv) + BN(residual) ) ------------------------------------------
    out = residual_merge(y3, st3, as_row(p["g3"]), as_row(p["b3"]),
                         yr, str_, as_row(p["gr"]), as_row(p["br"]), mo, tm2, eps)
    out = out[:mo].reshape(n, ho, wo, cout)
    return jnp.transpose(out, (0, 3, 1, 2))                          # NHWC -> NCHW


# ----------------------------------------------------------------------------------
# Pure-JAX reference (module semantics; mm_dtype lets us match the kernel's bf16
# matmul-input quantization for a tight check).
# ----------------------------------------------------------------------------------
def _ref_conv_bn(x, w, gamma, beta, stride, dilation, padding, relu, mm_dtype, eps=EPS):
    y = lax.conv_general_dilated(
        x.astype(mm_dtype), w.astype(mm_dtype), (stride, stride),
        ((padding, padding), (padding, padding)),
        rhs_dilation=(dilation, dilation),
        dimension_numbers=("NHWC", "HWIO", "NHWC"),
        preferred_element_type=jnp.float32,
        precision=lax.Precision.HIGHEST)
    mean = jnp.mean(y, axis=(0, 1, 2), keepdims=True)
    var = jnp.mean(jnp.square(y - mean), axis=(0, 1, 2), keepdims=True)
    y = (y - mean) * lax.rsqrt(var + eps) * gamma + beta
    return jnp.maximum(y, 0.0) if relu else y


def _ref_bottleneck_psp(x_nchw, p, *, stride, dilation, mm_dtype=jnp.float32):
    x = jnp.transpose(x_nchw, (0, 2, 3, 1)).astype(jnp.float32)
    a1 = _ref_conv_bn(x, p["w1"], p["g1"], p["b1"], 1, 1, 0, True, mm_dtype)
    a2 = _ref_conv_bn(a1, p["w2"], p["g2"], p["b2"], stride, dilation, dilation,
                      True, mm_dtype)
    c3 = _ref_conv_bn(a2, p["w3"], p["g3"], p["b3"], 1, 1, 0, False, mm_dtype)
    r = _ref_conv_bn(x, p["wr"], p["gr"], p["br"], stride, 1, 0, False, mm_dtype)
    return jnp.transpose(jnp.maximum(c3 + r, 0.0), (0, 3, 1, 2))


# ----------------------------------------------------------------------------------
def _make_params(key, cin, cmid, cout):
    ks = jax.random.split(key, 12)
    f = jax.random.normal
    return {
        "w1": 0.1 * f(ks[0], (1, 1, cin, cmid), jnp.float32),
        "g1": 1.0 + 0.1 * f(ks[1], (cmid,), jnp.float32),
        "b1": 0.1 * f(ks[2], (cmid,), jnp.float32),
        "w2": 0.1 * f(ks[3], (3, 3, cmid, cmid), jnp.float32),
        "g2": 1.0 + 0.1 * f(ks[4], (cmid,), jnp.float32),
        "b2": 0.1 * f(ks[5], (cmid,), jnp.float32),
        "w3": 0.1 * f(ks[6], (1, 1, cmid, cout), jnp.float32),
        "g3": 1.0 + 0.1 * f(ks[7], (cout,), jnp.float32),
        "b3": 0.1 * f(ks[8], (cout,), jnp.float32),
        "wr": 0.1 * f(ks[9], (1, 1, cin, cout), jnp.float32),
        "gr": 1.0 + 0.1 * f(ks[10], (cout,), jnp.float32),
        "br": 0.1 * f(ks[11], (cout,), jnp.float32),
    }


if __name__ == "__main__":
    key = jax.random.PRNGKey(0)
    kx1, kp1, kx2, kp2 = jax.random.split(key, 4)

    # ---- config A: stride-2 (downsampling) bottleneck ----------------------------
    n, cin, h, w, cmid, cout, s, d = 2, 64, 16, 16, 32, 128, 2, 1
    x = jax.random.normal(kx1, (n, cin, h, w), jnp.float32)
    p = _make_params(kp1, cin, cmid, cout)

    out = jax.block_until_ready(bottleneck_psp(x, p, stride=s, dilation=d))
    assert out.shape == (n, cout, h // s, w // s), out.shape

    # tight check against a reference with matching bf16 matmul-input numerics
    ref_bf16 = _ref_bottleneck_psp(x, p, stride=s, dilation=d, mm_dtype=jnp.bfloat16)
    max_t = float(jnp.max(jnp.abs(out - ref_bf16)))
    mean_t = float(jnp.mean(jnp.abs(out - ref_bf16)))
    assert max_t < 1e-2 and mean_t < 1e-3, (max_t, mean_t)

    # sanity check against the exact f32 module semantics (bf16 quantization gap)
    ref_f32 = _ref_bottleneck_psp(x, p, stride=s, dilation=d, mm_dtype=jnp.float32)
    rel = float(jnp.max(jnp.abs(out - ref_f32)) / (jnp.max(jnp.abs(ref_f32)) + 1e-6))
    mean_q = float(jnp.mean(jnp.abs(out - ref_f32)))
    assert rel < 1e-1 and mean_q < 6e-2, (rel, mean_q)

    # ---- config B: stride-1 dilated bottleneck (dilation=2) ----------------------
    n2, cin2, h2, w2_, cmid2, cout2, s2, d2 = 1, 32, 12, 12, 16, 64, 1, 2
    x2 = jax.random.normal(kx2, (n2, cin2, h2, w2_), jnp.float32)
    p2 = _make_params(kp2, cin2, cmid2, cout2)
    out2 = jax.block_until_ready(bottleneck_psp(x2, p2, stride=s2, dilation=d2))
    assert out2.shape == (n2, cout2, h2, w2_), out2.shape
    ref2 = _ref_bottleneck_psp(x2, p2, stride=s2, dilation=d2, mm_dtype=jnp.bfloat16)
    max2 = float(jnp.max(jnp.abs(out2 - ref2)))
    assert max2 < 1e-2, max2

    print("KERNEL_OK")
</pallas_src>

<mosaic_0001>
module attributes {stable_mosaic.version = 11 : i64} {
  func.func @kernel(%arg0: i32, %arg1: memref<256x64xbf16, #tpu.memory_space<vmem>>, %arg2: memref<64x32xbf16, #tpu.memory_space<vmem>>, %arg3: memref<256x32xf32, #tpu.memory_space<vmem>>, %arg4: memref<2x32xf32, #tpu.memory_space<vmem>>) attributes {dimension_semantics = [#tpu.dimension_semantics<arbitrary>], iteration_bounds = array<i64: 2>, scalar_prefetch = 0 : i64, scratch_operands = 0 : i64, tpu.core_type = #tpu.core_type<tc>, window_params = [{transform_indices = @transform_0, window_bounds = array<i64: 256, 64>}, {pipeline_mode = #tpu.pipeline_mode<synchronous>, transform_indices = @transform_1, window_bounds = array<i64: 64, 32>}, {transform_indices = @transform_2, window_bounds = array<i64: 256, 32>}, {pipeline_mode = #tpu.pipeline_mode<synchronous>, transform_indices = @transform_3, window_bounds = array<i64: 2, 32>}]} {
    %c0 = arith.constant 0 : index
    %c0_0 = arith.constant 0 : index
    %0 = vector.load %arg1[%c0, %c0_0] : memref<256x64xbf16, #tpu.memory_space<vmem>>, vector<256x64xbf16>
    %c0_1 = arith.constant 0 : index
    %c0_2 = arith.constant 0 : index
    %1 = vector.load %arg2[%c0_1, %c0_2] : memref<64x32xbf16, #tpu.memory_space<vmem>>, vector<64x32xbf16>
    %cst = arith.constant dense<0.000000e+00> : vector<256x32xf32>
    %2 = tpu.matmul %0, %1, %cst {dimension_numbers = #tpu.dot_dimension_numbers<[1], [0], [0], [1], [0, 0, 1, 1], [], []>} : vector<256x64xbf16>, vector<64x32xbf16>, vector<256x32xf32> -> vector<256x32xf32>
    %c0_3 = arith.constant 0 : index
    %c0_4 = arith.constant 0 : index
    %3 = vector.load %arg3[%c0_3, %c0_4] : memref<256x32xf32, #tpu.memory_space<vmem>>, vector<256x32xf32>
    tpu.vector_store %arg3[%c0_3, %c0_4], %2 {strides = array<i32>} : memref<256x32xf32, #tpu.memory_space<vmem>>, vector<256x32xf32>,
    %c0_i32 = arith.constant 0 : i32
    %4 = arith.cmpi eq, %arg0, %c0_i32 : i32
    %5 = arith.extui %4 : i1 to i32
    %c0_i32_5 = arith.constant 0 : i32
    %6 = arith.cmpi ne, %5, %c0_i32_5 : i32
    scf.if %6 {
      %cst_13 = arith.constant 0.000000e+00 : f32
      %26 = vector.broadcast %cst_13 : f32 to vector<2x32xf32>
      %c0_14 = arith.constant 0 : index
      %c0_15 = arith.constant 0 : index
      %27 = vector.load %arg4[%c0_14, %c0_15] : memref<2x32xf32, #tpu.memory_space<vmem>>, vector<2x32xf32>
      tpu.vector_store %arg4[%c0_14, %c0_15], %26 {strides = array<i32>} : memref<2x32xf32, #tpu.memory_space<vmem>>, vector<2x32xf32>,
    } else {
    }
    %7 = tpu.iota {dimensions = array<i32: 0>} : vector<256x1xi32>
    %c256_i32 = arith.constant 256 : i32
    %8 = arith.muli %arg0, %c256_i32 : i32
    %9 = vector.broadcast %8 : i32 to vector<256x1xi32>
    %10 = arith.addi %7, %9 : vector<256x1xi32>
    %c512_i32 = arith.constant 512 : i32
    %11 = vector.broadcast %c512_i32 : i32 to vector<256x1xi32>
    %12 = arith.cmpi slt, %10, %11 : vector<256x1xi32>
    %cst_6 = arith.constant 0.000000e+00 : f32
    %13 = vector.shape_cast %12 : vector<256x1xi1> to vector<256x1xi1>
    %14 = vector.broadcast %13 : vector<256x1xi1> to vector<256x32xi1>
    %15 = vector.broadcast %cst_6 : f32 to vector<256x32xf32>
    %16 = arith.select %14, %2, %15 : vector<256x32xi1>, vector<256x32xf32>
    %c0_7 = arith.constant 0 : index
    %c0_8 = arith.constant 0 : index
    %17 = vector.load %arg4[%c0_7, %c0_8] : memref<2x32xf32, #tpu.memory_space<vmem>>, vector<2x32xf32>
    %cst_9 = arith.constant dense<0.000000e+00> : vector<32xf32>
    %18 = vector.multi_reduction <add>, %16, %cst_9 [0] : vector<256x32xf32> to vector<32xf32>
    %19 = vector.shape_cast %18 : vector<32xf32> to vector<1x32xf32>
    %20 = arith.mulf %16, %2 : vector<256x32xf32>
    %cst_10 = arith.constant dense<0.000000e+00> : vector<32xf32>
    %21 = vector.multi_reduction <add>, %20, %cst_10 [0] : vector<256x32xf32> to vector<32xf32>
    %22 = vector.shape_cast %21 : vector<32xf32> to vector<1x32xf32>
    %23 = tpu.concatenate %19, %22 in 0 : vector<1x32xf32>, vector<1x32xf32> -> vector<2x32xf32>
    %24 = arith.addf %17, %23 : vector<2x32xf32>
    %c0_11 = arith.constant 0 : index
    %c0_12 = arith.constant 0 : index
    %25 = vector.load %arg4[%c0_11, %c0_12] : memref<2x32xf32, #tpu.memory_space<vmem>>, vector<2x32xf32>
    tpu.vector_store %arg4[%c0_11, %c0_12], %24 {strides = array<i32>} : memref<2x32xf32, #tpu.memory_space<vmem>>, vector<2x32xf32>,
    return
  }
  func.func @transform_0(%arg0: i32) -> (i32, i32) {
    %c0_i32 = arith.constant 0 : i32
    %c0_i32_0 = arith.constant 0 : i32
    return %arg0, %c0_i32 : i32, i32
  }
  func.func @transform_1(%arg0: i32) -> (i32, i32) {
    %c0_i32 = arith.constant 0 : i32
    %c0_i32_0 = arith.constant 0 : i32
    %c0_i32_1 = arith.constant 0 : i32
    return %c0_i32, %c0_i32_0 : i32, i32
  }
  func.func @transform_2(%arg0: i32) -> (i32, i32) {
    %c0_i32 = arith.constant 0 : i32
    %c0_i32_0 = arith.constant 0 : i32
    return %arg0, %c0_i32 : i32, i32
  }
  func.func @transform_3(%arg0: i32) -> (i32, i32) {
    %c0_i32 = arith.constant 0 : i32
    %c0_i32_0 = arith.constant 0 : i32
    %c0_i32_1 = arith.constant 0 : i32
    return %c0_i32, %c0_i32_0 : i32, i32
  }
}

</mosaic_0001>

<llo_original>
// kernel: tpu_custom_call.1
$region0: #{tpu_custom_call.1}
  #allocation0 [shape = 'u32[]', space=smem, size = 0x4, offset = 0x4, fixed_abs, tag = 'smem constant byte address 0x4 - core index']
  #allocation1 [shape = 'u32[72,128]{1,0:T(1,128)}', space=vmem, size = 0x9000, scoped, tag = 'internal scratch']
  %s0 = inlined_call_operand.vmem [shape: bf16[512,64], index: 0, kind: input, shape index: {}]
  %s1 = inlined_call_operand.vmem [shape: bf16[64,32], index: 1, kind: input, shape index: {}]
  %s2 = inlined_call_operand.vmem [shape: f32[512,32], index: 2, kind: output, shape index: {0}]
  %s3 = inlined_call_operand.hbm [shape: f32[2,32], index: 3, kind: output, shape index: {1}]
  %4 = xla_tuple %s2, %s3
  %s5 = sld [smem:[#allocation0]]
  $region53: #{tpu_custom_call.1} parent=0
    _
  %s7 = ssub.s32 1, %s5
  %s8 = scalar_select 0, %s7, %s5
  $region1: #{tpu_custom_call.1} parent=0
    #allocation2 [shape = 'u8[1024]{0}', space=vmem, size = 0x400, scoped, tag = 'output window, operand 1, single buffered']
    #allocation3 [shape = 's32[2]{0}', space=sflag, size = 0x8, scoped, tag = 'scoped memory for tpu_custom_call.1']
    %9 = vsyncpa [#allocation3], 0
    loop: start=0, step=1, limit=4
    $region2: #{tpu_custom_call.1} parent=1 // loop_pre_header
      _
    $region3: #{tpu_custom_call.1} parent=1 // loop_header
      %s11 = sphi 0, %s15
      %p12 = scmp.ge.s32.totalorder %s11, 4
      %s21 = sphi 0, %s23
      %s24 = sphi 0, %s21
      %s25 = sphi 0, %s24
      %s41 = sphi 0, %s25
      %s45 = sphi 0, %s45
      %s47 = sphi 0, %s45
      %s48 = sphi 0, %s47
      %s62 = sphi 0, %s48
      %s68 = sphi 0, %s70
      %s71 = sphi 0, %s68
      %s72 = sphi 0, %s71
      %s88 = sphi 0, %s72
      %s92 = sphi 0, %s92
      %s94 = sphi 0, %s92
      %s95 = sphi 0, %s94
      %s109 = sphi 0, %s95
    $region4: #{tpu_custom_call.1} parent=1 // loop_header_branch
      %14 = sbr.rel (%p12) target = $region8
    $region5: #{tpu_custom_call.1} parent=1 // loop_body
      %s16 = ssub.s32 %s11, 1
      %s17 = ssub.s32 %s11, 2
      %s18 = sadd.s32 %s11, 1
      %s19 = ssub.s32 %s11, %s18
      %p20 = scmp.eq.s32.totalorder %s19, 0
      %s22 = sadd.s32 %s21, 1
      %s23 = scalar_select %p20, %s21, %s22
      %p26 = pneg %p20
      %p27 = scmp.eq.s32.totalorder %s11, 1
      %p28 = por %p26, %p27
      %p29 = scmp.ne.s32.totalorder %s21, %s24
      %p30 = scmp.eq.s32.totalorder %s11, 0
      %p31 = por %p29, %p30
      %p32 = scmp.ne.s32.totalorder %s21, %s24
      %p33 = scmp.eq.s32.totalorder %s16, 1
      %p34 = por %p32, %p33
      %p35 = scmp.ne.s32.totalorder %s24, %s25
      %p36 = scmp.eq.s32.totalorder %s16, 0
      %p37 = por %p35, %p36
      %p38 = scmp.ne.s32.totalorder %s24, %s25
      %p39 = scmp.eq.s32.totalorder %s17, 1
      %p40 = por %p38, %p39
      %p42 = scmp.ne.s32.totalorder %s25, %s41
      %p43 = scmp.eq.s32.totalorder %s17, 0
      %p44 = por %p42, %p43
      %s46 = sadd.s32 %s45, 1
      %p49 = scmp.eq.s32.totalorder %s11, 1
      %p50 = scmp.ne.s32.totalorder %s45, %s47
      %p51 = scmp.eq.s32.totalorder %s11, 0
      %p52 = por %p50, %p51
      %p53 = scmp.ne.s32.totalorder %s45, %s47
      %p54 = scmp.eq.s32.totalorder %s16, 1
      %p55 = por %p53, %p54
      %p56 = scmp.ne.s32.totalorder %s47, %s48
      %p57 = scmp.eq.s32.totalorder %s16, 0
      %p58 = por %p56, %p57
      %p59 = scmp.ne.s32.totalorder %s47, %s48
      %p60 = scmp.eq.s32.totalorder %s17, 1
      %p61 = por %p59, %p60
      %p63 = scmp.ne.s32.totalorder %s48, %s62
      %p64 = scmp.eq.s32.totalorder %s17, 0
      %p65 = por %p63, %p64
      %s66 = ssub.s32 %s11, %s18
      %p67 = scmp.eq.s32.totalorder %s66, 0
      %s69 = sadd.s32 %s68, 1
      %s70 = scalar_select %p67, %s68, %s69
      %p73 = pneg %p67
      %p74 = scmp.eq.s32.totalorder %s11, 1
      %p75 = por %p73, %p74
      %p76 = scmp.ne.s32.totalorder %s68, %s71
      %p77 = scmp.eq.s32.totalorder %s11, 0
      %p78 = por %p76, %p77
      %p79 = scmp.ne.s32.totalorder %s68, %s71
      %p80 = scmp.eq.s32.totalorder %s16, 1
      %p81 = por %p79, %p80
      %p82 = scmp.ne.s32.totalorder %s71, %s72
      %p83 = scmp.eq.s32.totalorder %s16, 0
      %p84 = por %p82, %p83
      %p85 = scmp.ne.s32.totalorder %s71, %s72
      %p86 = scmp.eq.s32.totalorder %s17, 1
      %p87 = por %p85, %p86
      %p89 = scmp.ne.s32.totalorder %s72, %s88
      %p90 = scmp.eq.s32.totalorder %s17, 0
      %p91 = por %p89, %p90
      %s93 = sadd.s32 %s92, 1
      %p96 = scmp.eq.s32.totalorder %s11, 1
      %p97 = scmp.ne.s32.totalorder %s92, %s94
      %p98 = scmp.eq.s32.totalorder %s11, 0
      %p99 = por %p97, %p98
      %p100 = scmp.ne.s32.totalorder %s92, %s94
      %p101 = scmp.eq.s32.totalorder %s16, 1
      %p102 = por %p100, %p101
      %p103 = scmp.ne.s32.totalorder %s94, %s95
      %p104 = scmp.eq.s32.totalorder %s16, 0
      %p105 = por %p103, %p104
      %p106 = scmp.ne.s32.totalorder %s94, %s95
      %p107 = scmp.eq.s32.totalorder %s17, 1
      %p108 = por %p106, %p107
      %p110 = scmp.ne.s32.totalorder %s95, %s109
      %p111 = scmp.eq.s32.totalorder %s17, 0
      %p112 = por %p110, %p111
      %p113 = scmp.le.s32.totalorder 1, %s11
      %p114 = scmp.lt.s32.totalorder %s11, 3
      %p115 = pnand %p113, %p114
      %p116 = pneg %p115
      // Predicated region
      $region9: #{tpu_custom_call.1} parent=5 // pred_check
        _
      $region10: #{tpu_custom_call.1} parent=5 // pred_check_branch
        %118 = sbr.rel (%p115) target = $region12
      $region11: #{tpu_custom_call.1} parent=5 // pred_region
        %s119 = ssub.s32 %s11, 1
        // Predicated region
        $region13: #{tpu_custom_call.1} parent=11 // pred_check
          %p120 = pneg %p58
        $region14: #{tpu_custom_call.1} parent=11 // pred_check_branch
          %122 = sbr.rel (%p120) target = $region16
        $region15: #{tpu_custom_call.1} parent=11 // pred_region
          _
        $region16: #{tpu_custom_call.1} parent=11 // pred_fallthru
          _
      $region12: #{tpu_custom_call.1} parent=5 // pred_fallthru
        _
      %p123 = scmp.lt.s32.totalorder %s11, 2
      // Predicated region
      $region17: #{tpu_custom_call.1} parent=5 // pred_check
        %p124 = pneg %p123
      $region18: #{tpu_custom_call.1} parent=5 // pred_check_branch
        %126 = sbr.rel (%p124) target = $region20
      $region19: #{tpu_custom_call.1} parent=5 // pred_region
        // Predicated region
        $region21: #{tpu_custom_call.1} parent=19 // pred_check
          %p127 = pneg %p31
        $region22: #{tpu_custom_call.1} parent=19 // pred_check_branch
          %129 = sbr.rel (%p127) target = $region24
        $region23: #{tpu_custom_call.1} parent=19 // pred_region
          %s130 = smul.u32 32, %s11
          %p131 = scmp.lt.s32.totalorder %s130, 63
          %s132 = scalar_select %p131, %s130, 63
          %s133 = smul.addr %s132, 4
          %s134 = scalar_lea.vmem %s0, %s133
          %s135 = smul.u32 32, %s11
        $region24: #{tpu_custom_call.1} parent=19 // pred_fallthru
          _
      $region20: #{tpu_custom_call.1} parent=5 // pred_fallthru
        _
      %p136 = scmp.le.s32.totalorder 1, %s11
      %p137 = scmp.lt.s32.totalorder %s11, 3
      %p138 = pnand %p136, %p137
      %p139 = pneg %p138
      // Predicated region
      $region25: #{tpu_custom_call.1} parent=5 // pred_check
        _
      $region26: #{tpu_custom_call.1} parent=5 // pred_check_branch
        %141 = sbr.rel (%p138) target = $region28
      $region27: #{tpu_custom_call.1} parent=5 // pred_region
        %s142 = ssub.s32 %s11, 1
        %s143 = smul.u32 32, %s16
        %p144 = scmp.lt.s32.totalorder %s143, 63
        %s145 = scalar_select %p144, %s143, 63
        %s146 = smul.addr %s145, 4
        %s147 = scalar_lea.vmem %s0, %s146
        %p148 = pneg %p37
        %p149 = pneg %p34
        %p150 = pneg %p58
        %p151 = pneg %p55
        %p152 = pneg %p84
        %p153 = pneg %p81
        %s154 = smul.u32 32, %s16
        %p155 = scmp.lt.s32.totalorder %s154, 63
        %s156 = scalar_select %p155, %s154, 63
        %s157 = smul.addr %s156, 8
        %s158 = scalar_lea.vmem %s2, %s157
        %p159 = pneg %p105
        %p160 = pneg %p102
        %s161 = smul.u32 32, %s16
        %p162 = scmp.lt.s32.totalorder %s161, 63
        %s163 = scalar_select %p162, %s161, 63
        %s164 = smul.addr %s163, 4
        %s165 = scalar_lea.vmem %s0, %s164
        %s166 = smul.u32 32, %s16
        %s167 = smul.u32 32, %s16
        %p168 = scmp.lt.s32.totalorder %s167, 63
        %s169 = scalar_select %p168, %s167, 63
        %s170 = smul.addr %s169, 8
        %s171 = scalar_lea.vmem %s2, %s170
        %s172 = smul.u32 32, %s16
        %v174 = vld [vmem:[%s165] sm:$0xf]
        %v175 = vld [vmem:[%s165 + $0x4] sm:$0xf]
        %v176 = vld [vmem:[%s165 + $0x8] sm:$0xf]
        %v177 = vld [vmem:[%s165 + $0xc] sm:$0xf]
        %v178 = vld [vmem:[%s165 + $0x10] sm:$0xf]
        %v179 = vld [vmem:[%s165 + $0x14] sm:$0xf]
        %v180 = vld [vmem:[%s165 + $0x18] sm:$0xf]
        %v181 = vld [vmem:[%s165 + $0x1c] sm:$0xf]
        %v182 = vld [vmem:[%s165 + $0x20] sm:$0xf]
        %v183 = vld [vmem:[%s165 + $0x24] sm:$0xf]
        %v184 = vld [vmem:[%s165 + $0x28] sm:$0xf]
        %v185 = vld [vmem:[%s165 + $0x2c] sm:$0xf]
        %v186 = vld [vmem:[%s165 + $0x30] sm:$0xf]
        %v187 = vld [vmem:[%s165 + $0x34] sm:$0xf]
        %v188 = vld [vmem:[%s165 + $0x38] sm:$0xf]
        %v189 = vld [vmem:[%s165 + $0x3c] sm:$0xf]
        %v190 = vld [vmem:[%s165 + $0x40] sm:$0xf]
        %v191 = vld [vmem:[%s165 + $0x44] sm:$0xf]
        %v192 = vld [vmem:[%s165 + $0x48] sm:$0xf]
        %v193 = vld [vmem:[%s165 + $0x4c] sm:$0xf]
        %v194 = vld [vmem:[%s165 + $0x50] sm:$0xf]
        %v195 = vld [vmem:[%s165 + $0x54] sm:$0xf]
        %v196 = vld [vmem:[%s165 + $0x58] sm:$0xf]
        %v197 = vld [vmem:[%s165 + $0x5c] sm:$0xf]
        %v198 = vld [vmem:[%s165 + $0x60] sm:$0xf]
        %v199 = vld [vmem:[%s165 + $0x64] sm:$0xf]
        %v200 = vld [vmem:[%s165 + $0x68] sm:$0xf]
        %v201 = vld [vmem:[%s165 + $0x6c] sm:$0xf]
        %v202 = vld [vmem:[%s165 + $0x70] sm:$0xf]
        %v203 = vld [vmem:[%s165 + $0x74] sm:$0xf]
        %v204 = vld [vmem:[%s165 + $0x78] sm:$0xf]
        %v205 = vld [vmem:[%s165 + $0x7c] sm:$0xf]
        %v206 = vld [vmem:[%s1] sm:$0xf]
        %v207 = vld [vmem:[%s1 + $0x4] sm:$0xf]
        %v208 = vld [vmem:[%s1 + $0x8] sm:$0xf]
        %v209 = vld [vmem:[%s1 + $0xc] sm:$0xf]
        %v210 = vld [vmem:[%s1 + $0x10] sm:$0xf]
        %v211 = vld [vmem:[%s1 + $0x14] sm:$0xf]
        %v212 = vld [vmem:[%s1 + $0x18] sm:$0xf]
        %v213 = vld [vmem:[%s1 + $0x1c] sm:$0xf]
        %v246 = vunpack.c.l.b16 %v174
        %v247 = vunpack.c.l.b16 %v175
        %v248 = vunpack.c.l.b16 %v176
        %v249 = vunpack.c.l.b16 %v177
        %v250 = vunpack.c.l.b16 %v178
        %v251 = vunpack.c.l.b16 %v179
        %v252 = vunpack.c.l.b16 %v180
        %v253 = vunpack.c.l.b16 %v181
        %v254 = vunpack.c.l.b16 %v182
        %v255 = vunpack.c.l.b16 %v183
        %v256 = vunpack.c.l.b16 %v184
        %v257 = vunpack.c.l.b16 %v185
        %v258 = vunpack.c.l.b16 %v186
        %v259 = vunpack.c.l.b16 %v187
        %v260 = vunpack.c.l.b16 %v188
        %v261 = vunpack.c.l.b16 %v189
        %v262 = vunpack.c.l.b16 %v190
        %v263 = vunpack.c.l.b16 %v191
        %v264 = vunpack.c.l.b16 %v192
        %v265 = vunpack.c.l.b16 %v193
        %v266 = vunpack.c.l.b16 %v194
        %v267 = vunpack.c.l.b16 %v195
        %v268 = vunpack.c.l.b16 %v196
        %v269 = vunpack.c.l.b16 %v197
        %v270 = vunpack.c.l.b16 %v198
        %v271 = vunpack.c.l.b16 %v199
        %v272 = vunpack.c.l.b16 %v200
        %v273 = vunpack.c.l.b16 %v201
        %v274 = vunpack.c.l.b16 %v202
        %v275 = vunpack.c.l.b16 %v203
        %v276 = vunpack.c.l.b16 %v204
        %v277 = vunpack.c.l.b16 %v205
        %v278 = vpack.c.b16 %v247, %v246
        %v279 = vpack.c.b16 %v249, %v248
        %v280 = vpack.c.b16 %v251, %v250
        %v281 = vpack.c.b16 %v253, %v252
        %v282 = vpack.c.b16 %v255, %v254
        %v283 = vpack.c.b16 %v257, %v256
        %v284 = vpack.c.b16 %v259, %v258
        %v285 = vpack.c.b16 %v261, %v260
        %v286 = vpack.c.b16 %v263, %v262
        %v287 = vpack.c.b16 %v265, %v264
        %v288 = vpack.c.b16 %v267, %v266
        %v289 = vpack.c.b16 %v269, %v268
        %v290 = vpack.c.b16 %v271, %v270
        %v291 = vpack.c.b16 %v273, %v272
        %v292 = vpack.c.b16 %v275, %v274
        %v293 = vpack.c.b16 %v277, %v276
        %v302 = vunpack.c.l.b16 %v206
        %v303 = vunpack.c.l.b16 %v207
        %v304 = vunpack.c.l.b16 %v208
        %v305 = vunpack.c.l.b16 %v209
        %v306 = vunpack.c.l.b16 %v210
        %v307 = vunpack.c.l.b16 %v211
        %v308 = vunpack.c.l.b16 %v212
        %v309 = vunpack.c.l.b16 %v213
        %v310 = vpack.c.b16 %v303, %v302
        %v311 = vpack.c.b16 %v305, %v304
        %v312 = vpack.c.b16 %v307, %v306
        %v313 = vpack.c.b16 %v309, %v308
        %vm318 = vcmask 523264
        %v320 = vsel %vm318, %v278, 0
        %v323 = vsel %vm318, %v279, 0
        %v326 = vsel %vm318, %v280, 0
        %v329 = vsel %vm318, %v281, 0
        %v332 = vsel %vm318, %v282, 0
        %v335 = vsel %vm318, %v283, 0
        %v338 = vsel %vm318, %v284, 0
        %v341 = vsel %vm318, %v285, 0
        %v344 = vsel %vm318, %v286, 0
        %v347 = vsel %vm318, %v287, 0
        %v350 = vsel %vm318, %v288, 0
        %v353 = vsel %vm318, %v289, 0
        %v356 = vsel %vm318, %v290, 0
        %v359 = vsel %vm318, %v291, 0
        %v362 = vsel %vm318, %v292, 0
        %v365 = vsel %vm318, %v293, 0
        %367 = vmatpush.bf16.msra.mxu0 0
        %368 = vmatpush.bf16.msra.mxu0 0
        %369 = vmatpush.bf16.msra.mxu0 0
        %370 = vmatpush.bf16.msra.mxu0 0
        %371 = vmatpush.bf16.msra.mxu0 %v313
        %372 = vmatpush.bf16.msra.mxu0 %v312
        %373 = vmatpush.bf16.msra.mxu0 %v311
        %374 = vmatpush.bf16.msra.mxu0 %v310
        %375 = vmatmul.bf16.gmra.mxu0 %v320
        %v376 = vpop.f32.mrf.mxu0
        %v377 = vadd.f32 0.0, %v376
        %v378 = vpop.f32.mrf.mxu0
        %v379 = vadd.f32 0.0, %v378
        %380 = vmatmul.bf16.gmra.mxu0 %v323
        %v381 = vpop.f32.mrf.mxu0
        %v382 = vadd.f32 0.0, %v381
        %v383 = vpop.f32.mrf.mxu0
        %v384 = vadd.f32 0.0, %v383
        %385 = vmatmul.bf16.gmra.mxu0 %v326
        %v386 = vpop.f32.mrf.mxu0
        %v387 = vadd.f32 0.0, %v386
        %v388 = vpop.f32.mrf.mxu0
        %v389 = vadd.f32 0.0, %v388
        %390 = vmatmul.bf16.gmra.mxu0 %v329
        %v391 = vpop.f32.mrf.mxu0
        %v392 = vadd.f32 0.0, %v391
        %v393 = vpop.f32.mrf.mxu0
        %v394 = vadd.f32 0.0, %v393
        %395 = vmatmul.bf16.gmra.mxu0 %v332
        %v396 = vpop.f32.mrf.mxu0
        %v397 = vadd.f32 0.0, %v396
        %v398 = vpop.f32.mrf.mxu0
        %v399 = vadd.f32 0.0, %v398
        %400 = vmatmul.bf16.gmra.mxu0 %v335
        %v401 = vpop.f32.mrf.mxu0
        %v402 = vadd.f32 0.0, %v401
        %v403 = vpop.f32.mrf.mxu0
        %v404 = vadd.f32 0.0, %v403
        %405 = vmatmul.bf16.gmra.mxu0 %v338
        %v406 = vpop.f32.mrf.mxu0
        %v407 = vadd.f32 0.0, %v406
        %v408 = vpop.f32.mrf.mxu0
        %v409 = vadd.f32 0.0, %v408
        %410 = vmatmul.bf16.gmra.mxu0 %v341
        %v411 = vpop.f32.mrf.mxu0
        %v412 = vadd.f32 0.0, %v411
        %v413 = vpop.f32.mrf.mxu0
        %v414 = vadd.f32 0.0, %v413
        %415 = vmatmul.bf16.gmra.mxu0 %v344
        %v416 = vpop.f32.mrf.mxu0
        %v417 = vadd.f32 0.0, %v416
        %v418 = vpop.f32.mrf.mxu0
        %v419 = vadd.f32 0.0, %v418
        %420 = vmatmul.bf16.gmra.mxu0 %v347
        %v421 = vpop.f32.mrf.mxu0
        %v422 = vadd.f32 0.0, %v421
        %v423 = vpop.f32.mrf.mxu0
        %v424 = vadd.f32 0.0, %v423
        %425 = vmatmul.bf16.gmra.mxu0 %v350
        %v426 = vpop.f32.mrf.mxu0
        %v427 = vadd.f32 0.0, %v426
        %v428 = vpop.f32.mrf.mxu0
        %v429 = vadd.f32 0.0, %v428
        %430 = vmatmul.bf16.gmra.mxu0 %v353
        %v431 = vpop.f32.mrf.mxu0
        %v432 = vadd.f32 0.0, %v431
        %v433 = vpop.f32.mrf.mxu0
        %v434 = vadd.f32 0.0, %v433
        %435 = vmatmul.bf16.gmra.mxu0 %v356
        %v436 = vpop.f32.mrf.mxu0
        %v437 = vadd.f32 0.0, %v436
        %v438 = vpop.f32.mrf.mxu0
        %v439 = vadd.f32 0.0, %v438
        %440 = vmatmul.bf16.gmra.mxu0 %v359
        %v441 = vpop.f32.mrf.mxu0
        %v442 = vadd.f32 0.0, %v441
        %v443 = vpop.f32.mrf.mxu0
        %v444 = vadd.f32 0.0, %v443
        %445 = vmatmul.bf16.gmra.mxu0 %v362
        %v446 = vpop.f32.mrf.mxu0
        %v447 = vadd.f32 0.0, %v446
        %v448 = vpop.f32.mrf.mxu0
        %v449 = vadd.f32 0.0, %v448
        %450 = vmatmul.bf16.gmra.mxu0 %v365
        %v451 = vpop.f32.mrf.mxu0
        %v452 = vadd.f32 0.0, %v451
        %v453 = vpop.f32.mrf.mxu0
        %v454 = vadd.f32 0.0, %v453
        %455 = vdwg.mxu0
        %vm456 = vcmask 261120
        %457 = vst.msk [vmem:[%s171] sm:$0xff] %vm456, %v377
        %458 = vst.msk [vmem:[%s171 + $0x8] sm:$0xff] %vm456, %v379
        %459 = vst.msk [vmem:[%s171 + $0x10] sm:$0xff] %vm456, %v382
        %460 = vst.msk [vmem:[%s171 + $0x18] sm:$0xff] %vm456, %v384
        %461 = vst.msk [vmem:[%s171 + $0x20] sm:$0xff] %vm456, %v387
        %462 = vst.msk [vmem:[%s171 + $0x28] sm:$0xff] %vm456, %v389
        %463 = vst.msk [vmem:[%s171 + $0x30] sm:$0xff] %vm456, %v392
        %464 = vst.msk [vmem:[%s171 + $0x38] sm:$0xff] %vm456, %v394
        %465 = vst.msk [vmem:[%s171 + $0x40] sm:$0xff] %vm456, %v397
        %466 = vst.msk [vmem:[%s171 + $0x48] sm:$0xff] %vm456, %v399
        %467 = vst.msk [vmem:[%s171 + $0x50] sm:$0xff] %vm456, %v402
        %468 = vst.msk [vmem:[%s171 + $0x58] sm:$0xff] %vm456, %v404
        %469 = vst.msk [vmem:[%s171 + $0x60] sm:$0xff] %vm456, %v407
        %470 = vst.msk [vmem:[%s171 + $0x68] sm:$0xff] %vm456, %v409
        %471 = vst.msk [vmem:[%s171 + $0x70] sm:$0xff] %vm456, %v412
        %472 = vst.msk [vmem:[%s171 + $0x78] sm:$0xff] %vm456, %v414
        %473 = vst.msk [vmem:[%s171 + $0x80] sm:$0xff] %vm456, %v417
        %474 = vst.msk [vmem:[%s171 + $0x88] sm:$0xff] %vm456, %v419
        %475 = vst.msk [vmem:[%s171 + $0x90] sm:$0xff] %vm456, %v422
        %476 = vst.msk [vmem:[%s171 + $0x98] sm:$0xff] %vm456, %v424
        %477 = vst.msk [vmem:[%s171 + $0xa0] sm:$0xff] %vm456, %v427
        %478 = vst.msk [vmem:[%s171 + $0xa8] sm:$0xff] %vm456, %v429
        %479 = vst.msk [vmem:[%s171 + $0xb0] sm:$0xff] %vm456, %v432
        %480 = vst.msk [vmem:[%s171 + $0xb8] sm:$0xff] %vm456, %v434
        %481 = vst.msk [vmem:[%s171 + $0xc0] sm:$0xff] %vm456, %v437
        %482 = vst.msk [vmem:[%s171 + $0xc8] sm:$0xff] %vm456, %v439
        %483 = vst.msk [vmem:[%s171 + $0xd0] sm:$0xff] %vm456, %v442
        %484 = vst.msk [vmem:[%s171 + $0xd8] sm:$0xff] %vm456, %v444
        %485 = vst.msk [vmem:[%s171 + $0xe0] sm:$0xff] %vm456, %v447
        %486 = vst.msk [vmem:[%s171 + $0xe8] sm:$0xff] %vm456, %v449
        %487 = vst.msk [vmem:[%s171 + $0xf0] sm:$0xff] %vm456, %v452
        %488 = vst.msk [vmem:[%s171 + $0xf8] sm:$0xff] %vm456, %v454
        %p489 = scmp.eq.s32.totalorder %s16, 0
        // Predicated region
        $region29: #{tpu_custom_call.1} parent=27 // pred_check
          %p490 = pneg %p489
        $region30: #{tpu_custom_call.1} parent=27 // pred_check_branch
          %492 = sbr.rel (%p490) target = $region32
        $region31: #{tpu_custom_call.1} parent=27 // pred_region
          %vm493 = vcmask 254976
          %494 = vst.msk [vmem:[#allocation2] sm:$0x3] %vm493, 0.0
        $region32: #{tpu_custom_call.1} parent=27 // pred_fallthru
          _
        %v495 = vlaneseq
        %v496 = vshrl.u32 %v495, 7
        %v497 = vadd.s32 %v496, 8
        %v498 = vadd.s32 %v496, 16
        %v499 = vadd.s32 %v496, 24
        %v500 = vadd.s32 %v496, 32
        %v501 = vadd.s32 %v496, 40
        %v502 = vadd.s32 %v496, 48
        %v503 = vadd.s32 %v496, 56
        %v504 = vadd.s32 %v496, 64
        %v505 = vadd.s32 %v496, 72
        %v506 = vadd.s32 %v496, 80
        %v507 = vadd.s32 %v496, 88
        %v508 = vadd.s32 %v496, 96
        %v509 = vadd.s32 %v496, 104
        %v510 = vadd.s32 %v496, 112
        %v511 = vadd.s32 %v496, 120
        %v512 = vadd.s32 %v496, 128
        %v513 = vadd.s32 %v496, 136
        %v514 = vadd.s32 %v496, 144
        %v515 = vadd.s32 %v496, 152
        %v516 = vadd.s32 %v496, 160
        %v517 = vadd.s32 %v496, 168
        %v518 = vadd.s32 %v496, 176
        %v519 = vadd.s32 %v496, 184
        %v520 = vadd.s32 %v496, 192
        %v521 = vadd.s32 %v496, 200
        %v522 = vadd.s32 %v496, 208
        %v523 = vadd.s32 %v496, 216
        %v524 = vadd.s32 %v496, 224
        %v525 = vadd.s32 %v496, 232
        %v526 = vadd.s32 %v496, 240
        %v527 = vadd.s32 %v496, 248
        %s528 = smul.u32 %s16, 256
        %v529 = vstv %s528
        %v530 = vadd.s32 %v496, %v529
        %v531 = vadd.s32 %v497, %v529
        %v532 = vadd.s32 %v498, %v529
        %v533 = vadd.s32 %v499, %v529
        %v534 = vadd.s32 %v500, %v529
        %v535 = vadd.s32 %v501, %v529
        %v536 = vadd.s32 %v502, %v529
        %v537 = vadd.s32 %v503, %v529
        %v538 = vadd.s32 %v504, %v529
        %v539 = vadd.s32 %v505, %v529
        %v540 = vadd.s32 %v506, %v529
        %v541 = vadd.s32 %v507, %v529
        %v542 = vadd.s32 %v508, %v529
        %v543 = vadd.s32 %v509, %v529
        %v544 = vadd.s32 %v510, %v529
        %v545 = vadd.s32 %v511, %v529
        %v546 = vadd.s32 %v512, %v529
        %v547 = vadd.s32 %v513, %v529
        %v548 = vadd.s32 %v514, %v529
        %v549 = vadd.s32 %v515, %v529
        %v550 = vadd.s32 %v516, %v529
        %v551 = vadd.s32 %v517, %v529
        %v552 = vadd.s32 %v518, %v529
        %v553 = vadd.s32 %v519, %v529
        %v554 = vadd.s32 %v520, %v529
        %v555 = vadd.s32 %v521, %v529
        %v556 = vadd.s32 %v522, %v529
        %v557 = vadd.s32 %v523, %v529
        %v558 = vadd.s32 %v524, %v529
        %v559 = vadd.s32 %v525, %v529
        %v560 = vadd.s32 %v526, %v529
        %v561 = vadd.s32 %v527, %v529
        %vm562 = vcmp.lt.s32.totalorder %v530, 512
        %vm563 = vcmp.lt.s32.totalorder %v531, 512
        %vm564 = vcmp.lt.s32.totalorder %v532, 512
        %vm565 = vcmp.lt.s32.totalorder %v533, 512
        %vm566 = vcmp.lt.s32.totalorder %v534, 512
        %vm567 = vcmp.lt.s32.totalorder %v535, 512
        %vm568 = vcmp.lt.s32.totalorder %v536, 512
        %vm569 = vcmp.lt.s32.totalorder %v537, 512
        %vm570 = vcmp.lt.s32.totalorder %v538, 512
        %vm571 = vcmp.lt.s32.totalorder %v539, 512
        %vm572 = vcmp.lt.s32.totalorder %v540, 512
        %vm573 = vcmp.lt.s32.totalorder %v541, 512
        %vm574 = vcmp.lt.s32.totalorder %v542, 512
        %vm575 = vcmp.lt.s32.totalorder %v543, 512
        %vm576 = vcmp.lt.s32.totalorder %v544, 512
        %vm577 = vcmp.lt.s32.totalorder %v545, 512
        %vm578 = vcmp.lt.s32.totalorder %v546, 512
        %vm579 = vcmp.lt.s32.totalorder %v547, 512
        %vm580 = vcmp.lt.s32.totalorder %v548, 512
        %vm581 = vcmp.lt.s32.totalorder %v549, 512
        %vm582 = vcmp.lt.s32.totalorder %v550, 512
        %vm583 = vcmp.lt.s32.totalorder %v551, 512
        %vm584 = vcmp.lt.s32.totalorder %v552, 512
        %vm585 = vcmp.lt.s32.totalorder %v553, 512
        %vm586 = vcmp.lt.s32.totalorder %v554, 512
        %vm587 = vcmp.lt.s32.totalorder %v555, 512
        %vm588 = vcmp.lt.s32.totalorder %v556, 512
        %vm589 = vcmp.lt.s32.totalorder %v557, 512
        %vm590 = vcmp.lt.s32.totalorder %v558, 512
        %vm591 = vcmp.lt.s32.totalorder %v559, 512
        %vm592 = vcmp.lt.s32.totalorder %v560, 512
        %vm593 = vcmp.lt.s32.totalorder %v561, 512
        %v594 = vsel %vm562, 1, 0
        %v595 = vsel %vm563, 1, 0
        %v596 = vsel %vm564, 1, 0
        %v597 = vsel %vm565, 1, 0
        %v598 = vsel %vm566, 1, 0
        %v599 = vsel %vm567, 1, 0
        %v600 = vsel %vm568, 1, 0
        %v601 = vsel %vm569, 1, 0
        %v602 = vsel %vm570, 1, 0
        %v603 = vsel %vm571, 1, 0
        %v604 = vsel %vm572, 1, 0
        %v605 = vsel %vm573, 1, 0
        %v606 = vsel %vm574, 1, 0
        %v607 = vsel %vm575, 1, 0
        %v608 = vsel %vm576, 1, 0
        %v609 = vsel %vm577, 1, 0
        %v610 = vsel %vm578, 1, 0
        %v611 = vsel %vm579, 1, 0
        %v612 = vsel %vm580, 1, 0
        %v613 = vsel %vm581, 1, 0
        %v614 = vsel %vm582, 1, 0
        %v615 = vsel %vm583, 1, 0
        %v616 = vsel %vm584, 1, 0
        %v617 = vsel %vm585, 1, 0
        %v618 = vsel %vm586, 1, 0
        %v619 = vsel %vm587, 1, 0
        %v620 = vsel %vm588, 1, 0
        %v621 = vsel %vm589, 1, 0
        %v622 = vsel %vm590, 1, 0
        %v623 = vsel %vm591, 1, 0
        %v624 = vsel %vm592, 1, 0
        %v625 = vsel %vm593, 1, 0
        %vm626 = vcmp.eq.s32.totalorder %v594, 1
        %vm627 = vcmp.eq.s32.totalorder %v595, 1
        %vm628 = vcmp.eq.s32.totalorder %v596, 1
        %vm629 = vcmp.eq.s32.totalorder %v597, 1
        %vm630 = vcmp.eq.s32.totalorder %v598, 1
        %vm631 = vcmp.eq.s32.totalorder %v599, 1
        %vm632 = vcmp.eq.s32.totalorder %v600, 1
        %vm633 = vcmp.eq.s32.totalorder %v601, 1
        %vm634 = vcmp.eq.s32.totalorder %v602, 1
        %vm635 = vcmp.eq.s32.totalorder %v603, 1
        %vm636 = vcmp.eq.s32.totalorder %v604, 1
        %vm637 = vcmp.eq.s32.totalorder %v605, 1
        %vm638 = vcmp.eq.s32.totalorder %v606, 1
        %vm639 = vcmp.eq.s32.totalorder %v607, 1
        %vm640 = vcmp.eq.s32.totalorder %v608, 1
        %vm641 = vcmp.eq.s32.totalorder %v609, 1
        %vm642 = vcmp.eq.s32.totalorder %v610, 1
        %vm643 = vcmp.eq.s32.totalorder %v611, 1
        %vm644 = vcmp.eq.s32.totalorder %v612, 1
        %vm645 = vcmp.eq.s32.totalorder %v613, 1
        %vm646 = vcmp.eq.s32.totalorder %v614, 1
        %vm647 = vcmp.eq.s32.totalorder %v615, 1
        %vm648 = vcmp.eq.s32.totalorder %v616, 1
        %vm649 = vcmp.eq.s32.totalorder %v617, 1
        %vm650 = vcmp.eq.s32.totalorder %v618, 1
        %vm651 = vcmp.eq.s32.totalorder %v619, 1
        %vm652 = vcmp.eq.s32.totalorder %v620, 1
        %vm653 = vcmp.eq.s32.totalorder %v621, 1
        %vm654 = vcmp.eq.s32.totalorder %v622, 1
        %vm655 = vcmp.eq.s32.totalorder %v623, 1
        %vm656 = vcmp.eq.s32.totalorder %v624, 1
        %vm657 = vcmp.eq.s32.totalorder %v625, 1
        %v658 = vsel %vm626, %v377, 0.0
        %v659 = vsel %vm627, %v379, 0.0
        %v660 = vsel %vm628, %v382, 0.0
        %v661 = vsel %vm629, %v384, 0.0
        %v662 = vsel %vm630, %v387, 0.0
        %v663 = vsel %vm631, %v389, 0.0
        %v664 = vsel %vm632, %v392, 0.0
        %v665 = vsel %vm633, %v394, 0.0
        %v666 = vsel %vm634, %v397, 0.0
        %v667 = vsel %vm635, %v399, 0.0
        %v668 = vsel %vm636, %v402, 0.0
        %v669 = vsel %vm637, %v404, 0.0
        %v670 = vsel %vm638, %v407, 0.0
        %v671 = vsel %vm639, %v409, 0.0
        %v672 = vsel %vm640, %v412, 0.0
        %v673 = vsel %vm641, %v414, 0.0
        %v674 = vsel %vm642, %v417, 0.0
        %v675 = vsel %vm643, %v419, 0.0
        %v676 = vsel %vm644, %v422, 0.0
        %v677 = vsel %vm645, %v424, 0.0
        %v678 = vsel %vm646, %v427, 0.0
        %v679 = vsel %vm647, %v429, 0.0
        %v680 = vsel %vm648, %v432, 0.0
        %v681 = vsel %vm649, %v434, 0.0
        %v682 = vsel %vm650, %v437, 0.0
        %v683 = vsel %vm651, %v439, 0.0
        %v684 = vsel %vm652, %v442, 0.0
        %v685 = vsel %vm653, %v444, 0.0
        %v686 = vsel %vm654, %v447, 0.0
        %v687 = vsel %vm655, %v449, 0.0
        %v688 = vsel %vm656, %v452, 0.0
        %v689 = vsel %vm657, %v454, 0.0
        %v690 = vld [vmem:[#allocation2] sm:$0x3]
        %v691 = vsel %vm456, %v658, 0.0
        %v692 = vsel %vm456, %v659, 0.0
        %v693 = vadd.f32 %v691, %v692
        %v694 = vsel %vm456, %v660, 0.0
        %v695 = vadd.f32 %v693, %v694
        %v696 = vsel %vm456, %v661, 0.0
        %v697 = vadd.f32 %v695, %v696
        %v698 = vsel %vm456, %v662, 0.0
        %v699 = vadd.f32 %v697, %v698
        %v700 = vsel %vm456, %v663, 0.0
        %v701 = vadd.f32 %v699, %v700
        %v702 = vsel %vm456, %v664, 0.0
        %v703 = vadd.f32 %v701, %v702
        %v704 = vsel %vm456, %v665, 0.0
        %v705 = vadd.f32 %v703, %v704
        %v706 = vsel %vm456, %v666, 0.0
        %v707 = vadd.f32 %v705, %v706
        %v708 = vsel %vm456, %v667, 0.0
        %v709 = vadd.f32 %v707, %v708
        %v710 = vsel %vm456, %v668, 0.0
        %v711 = vadd.f32 %v709, %v710
        %v712 = vsel %vm456, %v669, 0.0
        %v713 = vadd.f32 %v711, %v712
        %v714 = vsel %vm456, %v670, 0.0
        %v715 = vadd.f32 %v713, %v714
        %v716 = vsel %vm456, %v671, 0.0
        %v717 = vadd.f32 %v715, %v716
        %v718 = vsel %vm456, %v672, 0.0
        %v719 = vadd.f32 %v717, %v718
        %v720 = vsel %vm456, %v673, 0.0
        %v721 = vadd.f32 %v719, %v720
        %v722 = vsel %vm456, %v674, 0.0
        %v723 = vadd.f32 %v721, %v722
        %v724 = vsel %vm456, %v675, 0.0
        %v725 = vadd.f32 %v723, %v724
        %v726 = vsel %vm456, %v676, 0.0
        %v727 = vadd.f32 %v725, %v726
        %v728 = vsel %vm456, %v677, 0.0
        %v729 = vadd.f32 %v727, %v728
        %v730 = vsel %vm456, %v678, 0.0
        %v731 = vadd.f32 %v729, %v730
        %v732 = vsel %vm456, %v679, 0.0
        %v733 = vadd.f32 %v731, %v732
        %v734 = vsel %vm456, %v680, 0.0
        %v735 = vadd.f32 %v733, %v734
        %v736 = vsel %vm456, %v681, 0.0
        %v737 = vadd.f32 %v735, %v736
        %v738 = vsel %vm456, %v682, 0.0
        %v739 = vadd.f32 %v737, %v738
        %v740 = vsel %vm456, %v683, 0.0
        %v741 = vadd.f32 %v739, %v740
        %v742 = vsel %vm456, %v684, 0.0
        %v743 = vadd.f32 %v741, %v742
        %v744 = vsel %vm456, %v685, 0.0
        %v745 = vadd.f32 %v743, %v744
        %v746 = vsel %vm456, %v686, 0.0
        %v747 = vadd.f32 %v745, %v746
        %v748 = vsel %vm456, %v687, 0.0
        %v749 = vadd.f32 %v747, %v748
        %v750 = vsel %vm456, %v688, 0.0
        %v751 = vadd.f32 %v749, %v750
        %v752 = vsel %vm456, %v689, 0.0
        %v753 = vadd.f32 %v751, %v752
        %v754 = vrot.slane %v753, 4
        %v755 = vadd.f32 %v753, %v754
        %v756 = vrot.slane %v755, 2
        %v757 = vadd.f32 %v755, %v756
        %v758 = vrot.slane %v757, 1
        %v759 = vadd.f32 %v757, %v758
        %v760 = vmul.f32 %v658, %v377
        %v761 = vmul.f32 %v659, %v379
        %v762 = vmul.f32 %v660, %v382
        %v763 = vmul.f32 %v661, %v384
        %v764 = vmul.f32 %v662, %v387
        %v765 = vmul.f32 %v663, %v389
        %v766 = vmul.f32 %v664, %v392
        %v767 = vmul.f32 %v665, %v394
        %v768 = vmul.f32 %v666, %v397
        %v769 = vmul.f32 %v667, %v399
        %v770 = vmul.f32 %v668, %v402
        %v771 = vmul.f32 %v669, %v404
        %v772 = vmul.f32 %v670, %v407
        %v773 = vmul.f32 %v671, %v409
        %v774 = vmul.f32 %v672, %v412
        %v775 = vmul.f32 %v673, %v414
        %v776 = vmul.f32 %v674, %v417
        %v777 = vmul.f32 %v675, %v419
        %v778 = vmul.f32 %v676, %v422
        %v779 = vmul.f32 %v677, %v424
        %v780 = vmul.f32 %v678, %v427
        %v781 = vmul.f32 %v679, %v429
        %v782 = vmul.f32 %v680, %v432
        %v783 = vmul.f32 %v681, %v434
        %v784 = vmul.f32 %v682, %v437
        %v785 = vmul.f32 %v683, %v439
        %v786 = vmul.f32 %v684, %v442
        %v787 = vmul.f32 %v685, %v444
        %v788 = vmul.f32 %v686, %v447
        %v789 = vmul.f32 %v687, %v449
        %v790 = vmul.f32 %v688, %v452
        %v791 = vmul.f32 %v689, %v454
        %v792 = vsel %vm456, %v760, 0.0
        %v793 = vsel %vm456, %v761, 0.0
        %v794 = vadd.f32 %v792, %v793
        %v795 = vsel %vm456, %v762, 0.0
        %v796 = vadd.f32 %v794, %v795
        %v797 = vsel %vm456, %v763, 0.0
        %v798 = vadd.f32 %v796, %v797
        %v799 = vsel %vm456, %v764, 0.0
        %v800 = vadd.f32 %v798, %v799
        %v801 = vsel %vm456, %v765, 0.0
        %v802 = vadd.f32 %v800, %v801
        %v803 = vsel %vm456, %v766, 0.0
        %v804 = vadd.f32 %v802, %v803
        %v805 = vsel %vm456, %v767, 0.0
        %v806 = vadd.f32 %v804, %v805
        %v807 = vsel %vm456, %v768, 0.0
        %v808 = vadd.f32 %v806, %v807
        %v809 = vsel %vm456, %v769, 0.0
        %v810 = vadd.f32 %v808, %v809
        %v811 = vsel %vm456, %v770, 0.0
        %v812 = vadd.f32 %v810, %v811
        %v813 = vsel %vm456, %v771, 0.0
        %v814 = vadd.f32 %v812, %v813
        %v815 = vsel %vm456, %v772, 0.0
        %v816 = vadd.f32 %v814, %v815
        %v817 = vsel %vm456, %v773, 0.0
        %v818 = vadd.f32 %v816, %v817
        %v819 = vsel %vm456, %v774, 0.0
        %v820 = vadd.f32 %v818, %v819
        %v821 = vsel %vm456, %v775, 0.0
        %v822 = vadd.f32 %v820, %v821
        %v823 = vsel %vm456, %v776, 0.0
        %v824 = vadd.f32 %v822, %v823
        %v825 = vsel %vm456, %v777, 0.0
        %v826 = vadd.f32 %v824, %v825
        %v827 = vsel %vm456, %v778, 0.0
        %v828 = vadd.f32 %v826, %v827
        %v829 = vsel %vm456, %v779, 0.0
        %v830 = vadd.f32 %v828, %v829
        %v831 = vsel %vm456, %v780, 0.0
        %v832 = vadd.f32 %v830, %v831
        %v833 = vsel %vm456, %v781, 0.0
        %v834 = vadd.f32 %v832, %v833
        %v835 = vsel %vm456, %v782, 0.0
        %v836 = vadd.f32 %v834, %v835
        %v837 = vsel %vm456, %v783, 0.0
        %v838 = vadd.f32 %v836, %v837
        %v839 = vsel %vm456, %v784, 0.0
        %v840 = vadd.f32 %v838, %v839
        %v841 = vsel %vm456, %v785, 0.0
        %v842 = vadd.f32 %v840, %v841
        %v843 = vsel %vm456, %v786, 0.0
        %v844 = vadd.f32 %v842, %v843
        %v845 = vsel %vm456, %v787, 0.0
        %v846 = vadd.f32 %v844, %v845
        %v847 = vsel %vm456, %v788, 0.0
        %v848 = vadd.f32 %v846, %v847
        %v849 = vsel %vm456, %v789, 0.0
        %v850 = vadd.f32 %v848, %v849
        %v851 = vsel %vm456, %v790, 0.0
        %v852 = vadd.f32 %v850, %v851
        %v853 = vsel %vm456, %v791, 0.0
        %v854 = vadd.f32 %v852, %v853
        %v855 = vrot.slane %v854, 4
        %v856 = vadd.f32 %v854, %v855
        %v857 = vrot.slane %v856, 2
        %v858 = vadd.f32 %v856, %v857
        %v859 = vrot.slane %v858, 1
        %v860 = vadd.f32 %v858, %v859
        %vm861 = vcmask 1040384
        %v862 = vsel %vm861, %v759, %v860
        %v863 = vadd.f32 %v690, %v862
        %vm864 = vcmask 254976
        %865 = vst.msk [vmem:[#allocation2] sm:$0x3] %vm864, %v863
        %s866 = smul.u32 32, %s16
        %p867 = scmp.lt.s32.totalorder %s866, 63
        %s868 = scalar_select %p867, %s866, 63
        %s869 = smul.addr %s868, 8
        %s870 = scalar_lea.vmem %s2, %s869
        // Predicated region
        $region33: #{tpu_custom_call.1} parent=27 // pred_check
          %p871 = pneg %p81
        $region34: #{tpu_custom_call.1} parent=27 // pred_check_branch
          %873 = sbr.rel (%p871) target = $region36
        $region35: #{tpu_custom_call.1} parent=27 // pred_region
          %s874 = smul.u32 32, %s16
        $region36: #{tpu_custom_call.1} parent=27 // pred_fallthru
          _
        // Predicated region
        $region37: #{tpu_custom_call.1} parent=27 // pred_check
          %p875 = pneg %p102
        $region38: #{tpu_custom_call.1} parent=27 // pred_check_branch
          %877 = sbr.rel (%p875) target = $region40
        $region39: #{tpu_custom_call.1} parent=27 // pred_region
          %879 = vsyncadd [#allocation3], 0
          %s881 = sshll.u32 [#allocation2], 4
          %s882 = int_to_ptr.vmem [resolvable:$true] %s881
          %s883 = sshll.u32 %s3, 4
          %s884 = int_to_ptr.hbm [resolvable:$true] %s883
          %886 = dma.vmem_to_hbm [thread:$0]  %s882, 32, %s884, [#allocation3]
        $region40: #{tpu_custom_call.1} parent=27 // pred_fallthru
          _
        // Predicated region
        $region41: #{tpu_custom_call.1} parent=27 // pred_check
          %p887 = pneg %p102
        $region42: #{tpu_custom_call.1} parent=27 // pred_check_branch
          %889 = sbr.rel (%p887) target = $region44
        $region43: #{tpu_custom_call.1} parent=27 // pred_region
          %891 = dma.done [#allocation3], 32
        $region44: #{tpu_custom_call.1} parent=27 // pred_fallthru
          _
      $region28: #{tpu_custom_call.1} parent=5 // pred_fallthru
        _
      %p892 = scmp.le.s32.totalorder 2, %s11
      // Predicated region
      $region45: #{tpu_custom_call.1} parent=5 // pred_check
        %p893 = pneg %p892
      $region46: #{tpu_custom_call.1} parent=5 // pred_check_branch
        %895 = sbr.rel (%p893) target = $region48
      $region47: #{tpu_custom_call.1} parent=5 // pred_region
        %s896 = ssub.s32 %s11, 2
        // Predicated region
        $region49: #{tpu_custom_call.1} parent=47 // pred_check
          %p897 = pneg %p87
        $region50: #{tpu_custom_call.1} parent=47 // pred_check_branch
          %899 = sbr.rel (%p897) target = $region52
        $region51: #{tpu_custom_call.1} parent=47 // pred_region
          %s900 = smul.u32 32, %s17
          %p901 = scmp.lt.s32.totalorder %s900, 63
          %s902 = scalar_select %p901, %s900, 63
          %s903 = smul.addr %s902, 8
          %s904 = scalar_lea.vmem %s2, %s903
        $region52: #{tpu_custom_call.1} parent=47 // pred_fallthru
          _
      $region48: #{tpu_custom_call.1} parent=5 // pred_fallthru
        _
    $region6: #{tpu_custom_call.1} parent=1 // loop_footer
      %s15 = sadd.s32 1, %s11
    $region7: #{tpu_custom_call.1} parent=1 // loop_footer_branch
      %10 = sbr.rel target = $region3
    $region8: #{tpu_custom_call.1} parent=1 // loop_exit
      _
    %905 = vsyncpa [#allocation3], 1
    %s906 = scalar_lea.sflag [#allocation3], 1
    %907 = vsyncpa %s906, 1

</llo_original>
